<compile_context>
chip_gen: v6e
topology: v6e:2x2x1
jax: 0.10.0
libtpu: 0.0.40
codegen_flags: <defaults>
</compile_context>

<pallas_src>
import math
import functools

import jax
import jax.numpy as jnp
from jax.experimental import pallas as pl
from jax.experimental.pallas import tpu as pltpu


def _round_up(a: int, b: int) -> int:
    return ((a + b - 1) // b) * b


def _effective_kn_tiles(K: int, N: int, tn: int, tk: int):
    """Shrink tn/tk down to the hardware-min-rounded problem dims (avoid big pads)."""
    tk_e = min(tk, _round_up(max(K, 1), 128))   # K is a lane dim of x and sublane dim of W
    tn_e = min(tn, _round_up(max(N, 1), 128))   # N is the lane dim of W / output
    return tn_e, tk_e


def _effective_tiles(M: int, K: int, N: int, tm: int, tn: int, tk: int):
    tn_e, tk_e = _effective_kn_tiles(K, N, tn, tk)
    tm_e = min(tm, _round_up(max(M, 1), 8))     # M is a sublane dim
    return tm_e, tn_e, tk_e


def _mlp_kernel(x_ref, w_ref, b_ref, o_ref):
    # x_ref: (tm, tk) compute dtype, w_ref: (tk, tn) compute dtype (already (K, N) layout),
    # b_ref: (1, tn) f32, o_ref: (tm, tn) f32.
    #
    # o_ref doubles as the K-reduction accumulator (output BlockSpec returns the same
    # (i, j) block for every k, so the block stays resident in VMEM and is written back
    # to HBM only when (i, j) changes). Bias is folded into the k==0 init, so no
    # finalize copy and no separate VMEM scratch tile is needed.
    @pl.when(pl.program_id(2) == 0)
    def _():
        o_ref[...] = jnp.broadcast_to(b_ref[...].astype(jnp.float32), o_ref.shape)

    o_ref[...] += jnp.dot(x_ref[...], w_ref[...], preferred_element_type=jnp.float32)


def prepare_params(weight, bias, *, tn: int = 512, tk: int = 512,
                   compute_dtype=jnp.float32):
    """One-time weight/bias preparation, hoisted out of the forward path.

    weight: (out_size, in_size) -- PyTorch nn.Linear layout.
    bias:   (out_size,)
    Returns (w_kn, b_row):
      w_kn:  (Kp, Np) = weight.T padded to tile multiples, cast to compute_dtype
      b_row: (1, Np)  = bias padded, kept in float32
    Use the SAME tn/tk when calling mlp_forward_prepared.
    """
    N, K = weight.shape
    tn_e, tk_e = _effective_kn_tiles(K, N, tn, tk)
    Kp, Np = _round_up(K, tk_e), _round_up(N, tn_e)

    w_kn = jnp.asarray(weight).T                      # (K, N)
    if (Kp, Np) != (K, N):
        w_kn = jnp.pad(w_kn, ((0, Kp - K), (0, Np - N)))
    w_kn = w_kn.astype(compute_dtype)

    b_row = jnp.asarray(bias, dtype=jnp.float32).reshape(1, N)
    if Np != N:
        b_row = jnp.pad(b_row, ((0, 0), (0, Np - N)))
    return w_kn, b_row


@functools.partial(
    jax.jit, static_argnames=("out_size", "tm", "tn", "tk", "w_buffers")
)
def mlp_forward_prepared(x, w_kn, b_row, *, out_size: int,
                         tm: int = 512, tn: int = 512, tk: int = 512,
                         w_buffers: int = 2):
    """y = x @ W^T + b using pre-prepared (padded, (K, N)-layout) weights.

    x:     (M, in_size)   any float dtype; cast to w_kn.dtype for the MXU.
    w_kn:  (Kp, Np)       from prepare_params (same tn/tk!).
    b_row: (1, Np)        float32.
    Returns (M, out_size) float32.
    """
    M, K = x.shape
    Kp, Np = w_kn.shape
    assert K <= Kp and out_size <= Np, "prepared weights do not match x / out_size"

    compute_dtype = w_kn.dtype
    tm_e, tn_e, tk_e = _effective_tiles(M, Kp, Np, tm, tn, tk)
    Mp = _round_up(M, tm_e)

    xp = x.astype(compute_dtype)
    if (Mp, Kp) != (M, K):
        xp = jnp.pad(xp, ((0, Mp - M), (0, Kp - K)))

    gm, gn, gk = Mp // tm_e, Np // tn_e, Kp // tk_e

    # Put the grid axis with more blocks first so that on v7x (2 TensorCores) the
    # parallel work actually splits even when M fits in a single row tile.
    swap_ij = gn > gm
    if swap_ij:
        grid = (gn, gm, gk)
        x_map = lambda j, i, k: (i, k)
        w_map = lambda j, i, k: (k, j)
        b_map = lambda j, i, k: (0, j)
        o_map = lambda j, i, k: (i, j)
    else:
        grid = (gm, gn, gk)
        x_map = lambda i, j, k: (i, k)
        w_map = lambda i, j, k: (k, j)
        b_map = lambda i, j, k: (0, j)
        o_map = lambda i, j, k: (i, j)

    w_spec_kwargs = {}
    if w_buffers > 2:
        # Extra pipelining depth for weight-bandwidth-bound skinny-M shapes.
        w_spec_kwargs["pipeline_mode"] = pl.Buffered(w_buffers)

    comp_bytes = jnp.dtype(compute_dtype).itemsize
    cost = pl.CostEstimate(
        flops=2 * Mp * Np * Kp,
        transcendentals=0,
        bytes_accessed=(Mp * Kp * comp_bytes * gn      # x re-read once per N tile
                        + Kp * Np * comp_bytes * gm    # W re-read once per M tile
                        + Np * 4                       # bias (effectively resident)
                        + Mp * Np * 4),                # output writeback
    )

    out_p = pl.pallas_call(
        _mlp_kernel,
        out_shape=jax.ShapeDtypeStruct((Mp, Np), jnp.float32),
        grid_spec=pltpu.PrefetchScalarGridSpec(
            num_scalar_prefetch=0,
            grid=grid,
            in_specs=[
                pl.BlockSpec((tm_e, tk_e), x_map),                  # x tile
                pl.BlockSpec((tk_e, tn_e), w_map, **w_spec_kwargs), # W^T tile (K, N)
                pl.BlockSpec((1, tn_e), b_map),                     # bias tile (per-j only)
            ],
            out_specs=pl.BlockSpec((tm_e, tn_e), o_map),
        ),
        compiler_params=pltpu.CompilerParams(
            dimension_semantics=("parallel", "parallel", "arbitrary"),
            # Above default scoped VMEM (16/32 MiB), below v7x's 64 MiB physical
            # ceiling, leaving headroom for compiler-internal scratch.
            vmem_limit_bytes=48 * 1024 * 1024,
        ),
        cost_estimate=cost,
    )(xp, w_kn, b_row)

    if (Mp, Np) != (M, out_size):
        out_p = out_p[:M, :out_size]
    return out_p


def mlp_forward(x, weight, bias, *, tm: int = 512, tn: int = 512, tk: int = 512,
                compute_dtype=jnp.float32, force_pallas: bool = False,
                min_flops_for_pallas: int = 1 << 21):
    """Convenience wrapper on raw (out, in)-layout weights.

    NOTE: this prepares (transposes/pads) the weight on every call; for repeated
    forwards of the same layer, call prepare_params() once and use
    mlp_forward_prepared() -- that is the fast path.
    """
    M, K = x.shape
    N, K2 = weight.shape
    assert K == K2, "in_size mismatch"

    # Small-shape bypass: fixed pallas_call/DMA overhead dwarfs tiny matmuls.
    if not force_pallas and (2 * M * N * K) < min_flops_for_pallas:
        return (jnp.asarray(x, jnp.float32) @ jnp.asarray(weight, jnp.float32).T
                + jnp.asarray(bias, jnp.float32))

    w_kn, b_row = prepare_params(weight, bias, tn=tn, tk=tk,
                                 compute_dtype=compute_dtype)
    return mlp_forward_prepared(x, w_kn, b_row, out_size=N, tm=tm, tn=tn, tk=tk)


def init_mlp_params(key, in_size, out_size):
    """Deterministic init matching FCLayer.reset_parameters():
    xavier_uniform_(weight, gain=1/in_size), bias zeroed."""
    gain = 1.0 / in_size
    bound = gain * math.sqrt(6.0 / (in_size + out_size))
    weight = jax.random.uniform(
        key, (out_size, in_size), dtype=jnp.float32, minval=-bound, maxval=bound
    )
    bias = jnp.zeros((out_size,), dtype=jnp.float32)
    return weight, bias


if __name__ == "__main__":
    key = jax.random.PRNGKey(0)
    kx, kw, kx2, kw2, kb2, kx3, kw3, kb3 = jax.random.split(key, 8)

    # --- Case 1: tiny module-typical shapes through the prepared Pallas path ---
    batch, in_size, out_size = 8, 32, 16
    x = jax.random.normal(kx, (batch, in_size), dtype=jnp.float32)
    weight, bias = init_mlp_params(kw, in_size, out_size)
    y_ref = x @ weight.T + bias

    w_kn, b_row = prepare_params(weight, bias)                    # one-time prep
    y = mlp_forward_prepared(x, w_kn, b_row, out_size=out_size)
    jax.block_until_ready(y)
    assert y.shape == (batch, out_size)
    assert jnp.allclose(y, y_ref, atol=1e-5, rtol=1e-5), "case 1 mismatch"

    # Same tiny shapes through the convenience wrapper (small-shape bypass path).
    y1b = mlp_forward(x, weight, bias)
    jax.block_until_ready(y1b)
    assert jnp.allclose(y1b, y_ref, atol=1e-5, rtol=1e-5), "case 1b mismatch"

    # --- Case 2: shapes exercising the full (M, N, K) tiled grid, f32 ----------
    M2, K2d, N2 = 256, 512, 256
    x2 = jax.random.normal(kx2, (M2, K2d), dtype=jnp.float32)
    w2 = jax.random.normal(kw2, (N2, K2d), dtype=jnp.float32) / math.sqrt(K2d)
    b2 = jax.random.normal(kb2, (N2,), dtype=jnp.float32) * 0.1

    w_kn2, b_row2 = prepare_params(w2, b2, tn=128, tk=256)
    y2 = mlp_forward_prepared(x2, w_kn2, b_row2, out_size=N2, tm=128, tn=128, tk=256)
    jax.block_until_ready(y2)
    y2_ref = (
        jax.lax.dot_general(
            x2, w2, (((1,), (1,)), ((), ())), precision=jax.lax.Precision.HIGHEST
        )
        + b2
    )
    assert y2.shape == (M2, N2)
    assert jnp.allclose(y2, y2_ref, atol=1e-3, rtol=1e-3), "case 2 mismatch"

    # --- Case 3: bf16 MXU inputs, f32 accumulation, swapped (j-leading) grid ---
    M3, K3, N3 = 64, 256, 512
    x3 = jax.random.normal(kx3, (M3, K3), dtype=jnp.float32)
    w3 = jax.random.normal(kw3, (N3, K3), dtype=jnp.float32) / math.sqrt(K3)
    b3 = jax.random.normal(kb3, (N3,), dtype=jnp.float32) * 0.1

    w_kn3, b_row3 = prepare_params(w3, b3, tn=256, tk=512, compute_dtype=jnp.bfloat16)
    y3 = mlp_forward_prepared(x3, w_kn3, b_row3, out_size=N3, tm=256, tn=256, tk=512)
    jax.block_until_ready(y3)
    y3_ref = jnp.dot(
        x3.astype(jnp.bfloat16), w3.T.astype(jnp.bfloat16),
        preferred_element_type=jnp.float32,
    ) + b3
    assert y3.shape == (M3, N3)
    assert y3.dtype == jnp.float32
    assert jnp.allclose(y3, y3_ref, atol=2e-2, rtol=2e-2), "case 3 mismatch"

    print("KERNEL_OK")
</pallas_src>

<mosaic_0001>
module attributes {stable_mosaic.version = 11 : i64} {
  func.func @_mlp_kernel(%arg0: i32, %arg1: i32, %arg2: i32, %arg3: memref<8x128xf32, #tpu.memory_space<vmem>>, %arg4: memref<128x128xf32, #tpu.memory_space<vmem>>, %arg5: memref<1x128xf32, #tpu.memory_space<vmem>>, %arg6: memref<8x128xf32, #tpu.memory_space<vmem>>) attributes {dimension_semantics = [#tpu.dimension_semantics<parallel>, #tpu.dimension_semantics<parallel>, #tpu.dimension_semantics<arbitrary>], iteration_bounds = array<i64: 1, 1, 1>, scalar_prefetch = 0 : i64, scratch_operands = 0 : i64, tpu.core_type = #tpu.core_type<tc>, window_params = [{transform_indices = @transform_0, window_bounds = array<i64: 8, 128>}, {transform_indices = @transform_1, window_bounds = array<i64: 128, 128>}, {transform_indices = @transform_2, window_bounds = array<i64: 1, 128>}, {transform_indices = @transform_3, window_bounds = array<i64: 8, 128>}]} {
    %c0_i32 = arith.constant 0 : i32
    %0 = arith.cmpi eq, %arg2, %c0_i32 : i32
    %1 = arith.extui %0 : i1 to i32
    %c0_i32_0 = arith.constant 0 : i32
    %2 = arith.cmpi ne, %1, %c0_i32_0 : i32
    scf.if %2 {
      %c0_8 = arith.constant 0 : index
      %c0_9 = arith.constant 0 : index
      %9 = vector.load %arg5[%c0_8, %c0_9] : memref<1x128xf32, #tpu.memory_space<vmem>>, vector<1x128xf32>
      %10 = vector.shape_cast %9 : vector<1x128xf32> to vector<1x128xf32>
      %11 = vector.broadcast %10 : vector<1x128xf32> to vector<8x128xf32>
      %c0_10 = arith.constant 0 : index
      %c0_11 = arith.constant 0 : index
      %12 = vector.load %arg6[%c0_10, %c0_11] : memref<8x128xf32, #tpu.memory_space<vmem>>, vector<8x128xf32>
      tpu.vector_store %arg6[%c0_10, %c0_11], %11 {strides = array<i32>} : memref<8x128xf32, #tpu.memory_space<vmem>>, vector<8x128xf32>,
    } else {
    }
    %c0 = arith.constant 0 : index
    %c0_1 = arith.constant 0 : index
    %3 = vector.load %arg6[%c0, %c0_1] : memref<8x128xf32, #tpu.memory_space<vmem>>, vector<8x128xf32>
    %c0_2 = arith.constant 0 : index
    %c0_3 = arith.constant 0 : index
    %4 = vector.load %arg3[%c0_2, %c0_3] : memref<8x128xf32, #tpu.memory_space<vmem>>, vector<8x128xf32>
    %c0_4 = arith.constant 0 : index
    %c0_5 = arith.constant 0 : index
    %5 = vector.load %arg4[%c0_4, %c0_5] : memref<128x128xf32, #tpu.memory_space<vmem>>, vector<128x128xf32>
    %cst = arith.constant dense<0.000000e+00> : vector<8x128xf32>
    %6 = tpu.matmul %4, %5, %cst {dimension_numbers = #tpu.dot_dimension_numbers<[1], [0], [0], [1], [0, 0, 1, 1], [], []>} : vector<8x128xf32>, vector<128x128xf32>, vector<8x128xf32> -> vector<8x128xf32>
    %7 = arith.addf %3, %6 : vector<8x128xf32>
    %c0_6 = arith.constant 0 : index
    %c0_7 = arith.constant 0 : index
    %8 = vector.load %arg6[%c0_6, %c0_7] : memref<8x128xf32, #tpu.memory_space<vmem>>, vector<8x128xf32>
    tpu.vector_store %arg6[%c0_6, %c0_7], %7 {strides = array<i32>} : memref<8x128xf32, #tpu.memory_space<vmem>>, vector<8x128xf32>,
    return
  }
  func.func @transform_0(%arg0: i32, %arg1: i32, %arg2: i32) -> (i32, i32) {
    %c0_i32 = arith.constant 0 : i32
    return %arg0, %arg2 : i32, i32
  }
  func.func @transform_1(%arg0: i32, %arg1: i32, %arg2: i32) -> (i32, i32) {
    %c0_i32 = arith.constant 0 : i32
    return %arg2, %arg1 : i32, i32
  }
  func.func @transform_2(%arg0: i32, %arg1: i32, %arg2: i32) -> (i32, i32) {
    %c0_i32 = arith.constant 0 : i32
    %c0_i32_0 = arith.constant 0 : i32
    return %c0_i32, %arg1 : i32, i32
  }
  func.func @transform_3(%arg0: i32, %arg1: i32, %arg2: i32) -> (i32, i32) {
    %c0_i32 = arith.constant 0 : i32
    return %arg0, %arg1 : i32, i32
  }
}

</mosaic_0001>

<llo_original>
// kernel: mlp_forward_prepared.1
$region0: #{mlp_forward_prepared.1}
  #allocation0 [shape = 'u32[]', space=smem, size = 0x4, offset = 0x4, fixed_abs, tag = 'smem constant byte address 0x4 - core index']
  #allocation1 [shape = 'u32[144,128]{1,0:T(1,128)}', space=vmem, size = 0x12000, scoped, tag = 'internal scratch']
  %s0 = inlined_call_operand.vmem [shape: f32[8,128], index: 0, kind: input, shape index: {}]
  %s1 = inlined_call_operand.hbm [shape: f32[128,128], index: 1, kind: input, shape index: {}]
  %s2 = inlined_call_operand.vmem [shape: f32[1,128], index: 2, kind: input, shape index: {}]
  %s3 = inlined_call_operand.hbm [shape: f32[8,128], index: 3, kind: output, shape index: {}]
  %s4 = sld [smem:[#allocation0]]
  $region30: #{mlp_forward_prepared.1} parent=0
    _
  %s6 = ssub.s32 1, %s4
  %s7 = scalar_select 0, %s6, %s4
  $region1: #{mlp_forward_prepared.1} parent=0
    #allocation2 [shape = 'u8[65536]{0}', space=vmem, size = 0x10000, scoped, tag = 'input window, operand 1, single buffered']
    #allocation3 [shape = 's32[1]{0}', space=sflag, size = 0x4, scoped, tag = 'scoped memory for mlp_forward_prepared.1']
    #allocation4 [shape = 's32[1]{0}', space=sflag, size = 0x4, scoped, tag = 'scoped memory for mlp_forward_prepared.1']
    #allocation5 [shape = 'u8[4096]{0}', space=vmem, size = 0x1000, scoped, tag = 'output window, operand 0, single buffered']
    %8 = vsyncpa [#allocation3], 0
    %9 = vsyncpa [#allocation4], 0
    // Predicated region
    $region2: #{mlp_forward_prepared.1} parent=1 // pred_check
      _
    $region3: #{mlp_forward_prepared.1} parent=1 // pred_check_branch
      %11 = sbr.rel (0) target = $region5
    $region4: #{mlp_forward_prepared.1} parent=1 // pred_region
      _
    $region5: #{mlp_forward_prepared.1} parent=1 // pred_fallthru
      _
    // Predicated region
    $region6: #{mlp_forward_prepared.1} parent=1 // pred_check
      _
    $region7: #{mlp_forward_prepared.1} parent=1 // pred_check_branch
      %13 = sbr.rel (0) target = $region9
    $region8: #{mlp_forward_prepared.1} parent=1 // pred_region
      %s15 = ssub.s32 2048, 2048
      %16 = vsyncadd [#allocation3], %s15
      %s17 = sshll.u32 [#allocation2], 4
      %s18 = int_to_ptr.vmem [resolvable:$true] %s17
      %23 = dma.hbm_to_vmem [thread:$0]  %s1, 2048, %s18, [#allocation3], 128, 128, 8
    $region9: #{mlp_forward_prepared.1} parent=1 // pred_fallthru
      _
    // Predicated region
    $region10: #{mlp_forward_prepared.1} parent=1 // pred_check
      _
    $region11: #{mlp_forward_prepared.1} parent=1 // pred_check_branch
      %25 = sbr.rel (0) target = $region13
    $region12: #{mlp_forward_prepared.1} parent=1 // pred_region
      _
    $region13: #{mlp_forward_prepared.1} parent=1 // pred_fallthru
      _
    // Predicated region
    $region14: #{mlp_forward_prepared.1} parent=1 // pred_check
      _
    $region15: #{mlp_forward_prepared.1} parent=1 // pred_check_branch
      %27 = sbr.rel (0) target = $region17
    $region16: #{mlp_forward_prepared.1} parent=1 // pred_region
      %28 = dma.done [#allocation3], 2048
    $region17: #{mlp_forward_prepared.1} parent=1 // pred_fallthru
      _
    %p29 = scmp.eq.s32.totalorder 0, 0
    // Predicated region
    $region18: #{mlp_forward_prepared.1} parent=1 // pred_check
      %p30 = pneg %p29
    $region19: #{mlp_forward_prepared.1} parent=1 // pred_check_branch
      %32 = sbr.rel (%p30) target = $region21
    $region20: #{mlp_forward_prepared.1} parent=1 // pred_region
      %v33 = vld [vmem:[%s2] sm:$0x1]
      %v35 = vlaneseq
      %v36 = vshrl.u32 %v35, 7
      %v37 = vsub.s32 0, %v36
      %v38 = vrot.slane %v33, %v37
      %40 = vst [vmem:[#allocation5] sm:$0xff] %v38
    $region21: #{mlp_forward_prepared.1} parent=1 // pred_fallthru
      _
    %v41 = vld [vmem:[#allocation5] sm:$0xff]
    %v42 = vld [vmem:[%s0] sm:$0xff]
    %v43 = vld [vmem:[#allocation2] sm:$0xff]
    %v44 = vld [vmem:[#allocation2 + $0x8] sm:$0xff]
    %v45 = vld [vmem:[#allocation2 + $0x10] sm:$0xff]
    %v46 = vld [vmem:[#allocation2 + $0x18] sm:$0xff]
    %v47 = vld [vmem:[#allocation2 + $0x20] sm:$0xff]
    %v48 = vld [vmem:[#allocation2 + $0x28] sm:$0xff]
    %v49 = vld [vmem:[#allocation2 + $0x30] sm:$0xff]
    %v50 = vld [vmem:[#allocation2 + $0x38] sm:$0xff]
    %v51 = vld [vmem:[#allocation2 + $0x40] sm:$0xff]
    %v52 = vld [vmem:[#allocation2 + $0x48] sm:$0xff]
    %v53 = vld [vmem:[#allocation2 + $0x50] sm:$0xff]
    %v54 = vld [vmem:[#allocation2 + $0x58] sm:$0xff]
    %v55 = vld [vmem:[#allocation2 + $0x60] sm:$0xff]
    %v56 = vld [vmem:[#allocation2 + $0x68] sm:$0xff]
    %v57 = vld [vmem:[#allocation2 + $0x70] sm:$0xff]
    %v58 = vld [vmem:[#allocation2 + $0x78] sm:$0xff]
    %59 = vmatprep.subr.mxu0 0.0
    %60 = vmatpush1.msra.mxu0 %v58
    %61 = vmatprep.subr.mxu0 0.0
    %62 = vmatpush1.msra.mxu0 %v57
    %63 = vmatprep.subr.mxu0 0.0
    %64 = vmatpush1.msra.mxu0 %v56
    %65 = vmatprep.subr.mxu0 0.0
    %66 = vmatpush1.msra.mxu0 %v55
    %67 = vmatprep.subr.mxu0 0.0
    %68 = vmatpush1.msra.mxu0 %v54
    %69 = vmatprep.subr.mxu0 0.0
    %70 = vmatpush1.msra.mxu0 %v53
    %71 = vmatprep.subr.mxu0 0.0
    %72 = vmatpush1.msra.mxu0 %v52
    %73 = vmatprep.subr.mxu0 0.0
    %74 = vmatpush1.msra.mxu0 %v51
    %75 = vmatprep.subr.mxu0 0.0
    %76 = vmatpush1.msra.mxu0 %v50
    %77 = vmatprep.subr.mxu0 0.0
    %78 = vmatpush1.msra.mxu0 %v49
    %79 = vmatprep.subr.mxu0 0.0
    %80 = vmatpush1.msra.mxu0 %v48
    %81 = vmatprep.subr.mxu0 0.0
    %82 = vmatpush1.msra.mxu0 %v47
    %83 = vmatprep.subr.mxu0 0.0
    %84 = vmatpush1.msra.mxu0 %v46
    %85 = vmatprep.subr.mxu0 0.0
    %86 = vmatpush1.msra.mxu0 %v45
    %87 = vmatprep.subr.mxu0 0.0
    %88 = vmatpush1.msra.mxu0 %v44
    %89 = vmatprep.subr.mxu0 0.0
    %90 = vmatpush1.msra.mxu0 %v43
    %91 = vmatprep.subr.mxu0 0.0
    %92 = vmatpush2.msra.mxu0 0.0
    %93 = vmatprep.subr.mxu0 0.0
    %94 = vmatpush2.msra.mxu0 0.0
    %95 = vmatprep.subr.mxu0 0.0
    %96 = vmatpush2.msra.mxu0 0.0
    %97 = vmatprep.subr.mxu0 0.0
    %98 = vmatpush2.msra.mxu0 0.0
    %99 = vmatprep.subr.mxu0 0.0
    %100 = vmatpush2.msra.mxu0 0.0
    %101 = vmatprep.subr.mxu0 0.0
    %102 = vmatpush2.msra.mxu0 0.0
    %103 = vmatprep.subr.mxu0 0.0
    %104 = vmatpush2.msra.mxu0 0.0
    %105 = vmatprep.subr.mxu0 0.0
    %106 = vmatpush2.msra.mxu0 0.0
    %107 = vmatprep.subr.mxu0 0.0
    %108 = vmatpush2.msra.mxu0 0.0
    %109 = vmatprep.subr.mxu0 0.0
    %110 = vmatpush2.msra.mxu0 0.0
    %111 = vmatprep.subr.mxu0 0.0
    %112 = vmatpush2.msra.mxu0 0.0
    %113 = vmatprep.subr.mxu0 0.0
    %114 = vmatpush2.msra.mxu0 0.0
    %115 = vmatprep.subr.mxu0 0.0
    %116 = vmatpush2.msra.mxu0 0.0
    %117 = vmatprep.subr.mxu0 0.0
    %118 = vmatpush2.msra.mxu0 0.0
    %119 = vmatprep.subr.mxu0 0.0
    %120 = vmatpush2.msra.mxu0 0.0
    %121 = vmatprep.subr.mxu0 0.0
    %122 = vmatpush2.msra.mxu0 0.0
    %123 = vmatprep.mubr.f32.mxu0 0.0
    %124 = vmatmul.mubr.f32.gmra.mxu0 %v42
    %v125 = vpop.f32.mrf.mxu0
    %v126 = vadd.f32 0.0, %v125
    %v127 = vpop.f32.mrf.mxu0
    %128 = vdwg.mxu0
    %v129 = vadd.f32 %v41, %v126
    %130 = vst [vmem:[#allocation5] sm:$0xff] %v129
    // Predicated region
    $region22: #{mlp_forward_prepared.1} parent=1 // pred_check
      _
    $region23: #{mlp_forward_prepared.1} parent=1 // pred_check_branch
      %132 = sbr.rel (0) target = $region25
    $region24: #{mlp_forward_prepared.1} parent=1 // pred_region
      %s134 = ssub.s32 128, 128
      %135 = vsyncadd [#allocation4], %s134
      %s137 = sshll.u32 [#allocation5], 4
      %s138 = int_to_ptr.vmem [resolvable:$true] %s137
      %140 = dma.vmem_to_hbm [thread:$0]  %s138, 128, %s3, [#allocation4]
    $region25: #{mlp_forward_prepared.1} parent=1 // pred_fallthru
      _
    // Predicated region
    $region26: #{mlp_forward_prepared.1} parent=1 // pred_check
      _
    $region27: #{mlp_forward_prepared.1} parent=1 // pred_check_branch
      %142 = sbr.rel (0) target = $region29
    $region28: #{mlp_forward_prepared.1} parent=1 // pred_region
      %143 = dma.done [#allocation4], 128
    $region29: #{mlp_forward_prepared.1} parent=1 // pred_fallthru
      _
    %144 = vsyncpa [#allocation3], 1
    %145 = vsyncpa [#allocation4], 1

</llo_original>
